<compile_context>
chip_gen: v7x
topology: tpu7x:2x2x1
jax: 0.10.0
libtpu: 0.0.40
codegen_flags: <defaults>
</compile_context>

<pallas_src>
import jax
import jax.numpy as jnp
from jax import lax
from jax.experimental import pallas as pl
from jax.experimental.pallas import tpu as pltpu

# ---- RealGuidance / sub-module hyper-parameters (from __init__ defaults) ----
ALPHA = 0.5          # RealGuidance.alpha
BETA = 0.1           # RealGuidance.beta
NUM_STEP = 10        # RealGuidance.num_step
R_REP = 6.0          # Repeller.radius
R_OFF = 1.0          # NoOffRoad.radius
EPS = 1e-6           # epsilon in both losses
W_REP = 10.0         # guidance_factors['repeller']
W_OFF = 5.0          # guidance_factors['no_offroad']


def _make_kernel(A: int, T: int):
    N = A * T

    def kernel(x0_ref, rq_ref, rc_ref, rs_ref, out_ref):
        xx0 = x0_ref[0:1, :]          # (1, N) initial x coords (lane-dense, agent-major)
        xy0 = x0_ref[1:2, :]          # (1, N) initial y coords
        rq = rq_ref[...]              # (P, 8)
        rc = rc_ref[...]              # (P, 8)
        rs = rs_ref[...]              # (8, P)

        # loop-invariant rows (hoisted; fori_loop body traced once)
        ones_row = jnp.ones((1, N), jnp.float32)
        zeros_pad = jnp.zeros((4, N), jnp.float32)
        one11 = jnp.ones((1, 1), jnp.float32)   # keeps pl.reciprocal on the vector path

        def step(_, carry):
            xx, xy = carry            # (1, N) each

            # -------- Repeller: grad of sum(relu((1 - dist/R)*(1-eye))) / (count+eps) ----
            if A > 1:
                # row j-1 = coords rolled by j*T lanes -> pairs (i, i±j mod A), j=1..A-1
                xxs = jnp.concatenate(
                    [pltpu.roll(xx, j * T, axis=1) for j in range(1, A)], axis=0)  # (A-1, N)
                xys = jnp.concatenate(
                    [pltpu.roll(xy, j * T, axis=1) for j in range(1, A)], axis=0)
                dx = xx - xxs
                dy = xy - xys
                d2p = dx * dx + dy * dy
                act = d2p < R_REP * R_REP
                cnt_r = jnp.sum(act.astype(jnp.float32))
                # d/dx_i of (1 - dist_ij/R) over both orderings -> -2/(R*dist) * (x_i - x_j)
                coef = jnp.where(jnp.logical_and(act, d2p > 0.0),
                                 (-2.0 / R_REP) * lax.rsqrt(d2p), 0.0)
                rep_gx = jnp.sum(coef * dx, axis=0, keepdims=True)   # (1, N)
                rep_gy = jnp.sum(coef * dy, axis=0, keepdims=True)
            else:
                cnt_r = jnp.float32(0.0)
                rep_gx = jnp.zeros((1, N), jnp.float32)
                rep_gy = jnp.zeros((1, N), jnp.float32)

            # -------- NoOffRoad: grad of sum(relu(R + signed_dist)) / (count+eps) --------
            x2 = xx * xx + xy * xy                                         # (1, N)
            X8 = jnp.concatenate([xx, xy, ones_row, x2, zeros_pad], axis=0)  # (8, N)
            # MXU: full squared-distance and cross-product maps, constants folded in
            d2 = jnp.dot(rq, X8, preferred_element_type=jnp.float32)       # (P, N)
            crs = jnp.dot(rc, X8, preferred_element_type=jnp.float32)      # (P, N)
            d2min = jnp.min(d2, axis=0, keepdims=True)                     # (1, N)
            cge = crs >= 0.0
            sel = jnp.logical_and(d2 <= d2min,
                                  jnp.logical_or(cge, d2 < R_OFF * R_OFF))
            w = jnp.where(sel, jnp.where(cge, 1.0, -1.0), 0.0)             # (P, N) in {-1,0,1}
            # MXU reduction: rows = [sum_p w*px, sum_p w*py, sum_p w, 0...]
            red = jnp.dot(rs, w, preferred_element_type=jnp.float32)       # (8, N)
            wpx = red[0:1, :]
            wpy = red[1:2, :]
            ws = red[2:3, :]
            inv_dmin = jnp.where(d2min > 0.0, lax.rsqrt(d2min), 0.0)       # (1, N)
            # off_g = inv_dmin * sum_p w*(x - p)  =  inv_dmin * (x*sum(w) - sum(w*p))
            off_gx = inv_dmin * (xx * ws - wpx)
            off_gy = inv_dmin * (xy * ws - wpy)
            # active(a,t) <=> nearest point closer than R, or nearest selected with cross>=0
            cnt_o = jnp.sum(jnp.logical_or(d2min < R_OFF * R_OFF,
                                           ws > 0.0).astype(jnp.float32))

            # -------- loss weights / count denominators (EUP approx reciprocal) --------
            s_rep = W_REP * pl.reciprocal((cnt_r + EPS) * one11, approx=True)   # (1, 1)
            s_off = W_OFF * pl.reciprocal((cnt_o + EPS) * one11, approx=True)   # (1, 1)

            gx = s_rep * rep_gx + s_off * off_gx               # (1, N)
            gy = s_rep * rep_gy + s_off * off_gy

            # -------- gradient step + trust-region projection around x0 --------
            xx_n = xx0 + jnp.clip(xx - ALPHA * gx - xx0, -BETA, BETA)
            xy_n = xy0 + jnp.clip(xy - ALPHA * gy - xy0, -BETA, BETA)
            return xx_n, xy_n

        xx_f, xy_f = lax.fori_loop(0, NUM_STEP, step, (xx0, xy0))
        out_ref[...] = jnp.concatenate([xx_f, xy_f], axis=0)    # single fused (2, N) store

    return kernel


def real_guidance_forward(x, roadgraph_points):
    """x: (A, T, 2) f32; roadgraph_points: (P, 8) f32 = concat([xyz, dir, ids, type], -1)."""
    A, T, _ = x.shape
    N = A * T
    P = roadgraph_points.shape[0]

    # coords, lane-dense agent-major: row0 = x, row1 = y
    x0 = jnp.transpose(x.astype(jnp.float32), (2, 0, 1)).reshape(2, N)

    rg = roadgraph_points.astype(jnp.float32)
    px, py = rg[:, 0], rg[:, 1]
    ex, ey = rg[:, 3], rg[:, 4]
    p2 = px * px + py * py
    c0 = ex * py - ey * px
    zc = jnp.zeros((P,), jnp.float32)
    oc = jnp.ones((P,), jnp.float32)
    # d2[p,n]  = -2px*xx - 2py*xy + p2 + (xx^2+xy^2)       (columns match X8 rows)
    rq = jnp.stack([-2.0 * px, -2.0 * py, p2, oc, zc, zc, zc, zc], axis=1)    # (P, 8)
    # cross[p,n] = ex*(xy-py) - ey*(xx-px) = -ey*xx + ex*xy - (ex*py - ey*px)
    rc = jnp.stack([-ey, ex, -c0, zc, zc, zc, zc, zc], axis=1)                # (P, 8)
    # rs @ w -> [sum_p w*px ; sum_p w*py ; sum_p w ; 0...]
    rs = jnp.stack([px, py, oc, zc, zc, zc, zc, zc], axis=0)                  # (8, P)

    out = pl.pallas_call(
        _make_kernel(A, T),
        out_shape=jax.ShapeDtypeStruct((2, N), jnp.float32),
        grid=(1,),
        in_specs=[
            pl.BlockSpec((2, N), lambda i: (0, 0)),
            pl.BlockSpec((P, 8), lambda i: (0, 0)),
            pl.BlockSpec((P, 8), lambda i: (0, 0)),
            pl.BlockSpec((8, P), lambda i: (0, 0)),
        ],
        out_specs=pl.BlockSpec((2, N), lambda i: (0, 0)),
        compiler_params=pltpu.CompilerParams(dimension_semantics=("arbitrary",)),
    )(x0, rq, rc, rs)

    return jnp.transpose(out.reshape(2, A, T), (1, 2, 0))       # (A, T, 2)


if __name__ == "__main__":
    key = jax.random.PRNGKey(0)
    A, T, P = 8, 16, 128
    k1, k2, k3 = jax.random.split(key, 3)

    # x: (agent_num, time_step, 2) model output
    x = jax.random.normal(k1, (A, T, 2), dtype=jnp.float32) * 3.0

    # synthetic HeteroData['roadgraph_points']: xyz (P,3), dir (P,3), ids (P,), type (P,)
    xyz = jax.random.normal(k2, (P, 3), dtype=jnp.float32) * 5.0
    dir_raw = jax.random.normal(k3, (P, 3), dtype=jnp.float32)
    dirs = dir_raw / (jnp.linalg.norm(dir_raw, axis=-1, keepdims=True) + 1e-8)
    ids = jnp.arange(P, dtype=jnp.float32)[:, None]
    typ = jnp.zeros((P, 1), dtype=jnp.float32)
    roadgraph_points = jnp.concatenate([xyz, dirs, ids, typ], axis=-1)  # (P, 8)

    out = real_guidance_forward(x, roadgraph_points)
    out = jax.block_until_ready(out)

    assert out.shape == (A, T, 2)
    assert bool(jnp.all(jnp.isfinite(out)))
    # final projection guarantees |x_out - x_0| <= beta
    assert float(jnp.max(jnp.abs(out - x))) <= BETA + 1e-5
    print("KERNEL_OK")
</pallas_src>

<mosaic_0001>
module attributes {stable_mosaic.version = 11 : i64} {
  func.func @kernel(%arg0: i32, %arg1: memref<2x128xf32, #tpu.memory_space<vmem>>, %arg2: memref<128x8xf32, #tpu.memory_space<vmem>>, %arg3: memref<128x8xf32, #tpu.memory_space<vmem>>, %arg4: memref<8x128xf32, #tpu.memory_space<vmem>>, %arg5: memref<2x128xf32, #tpu.memory_space<vmem>>) attributes {dimension_semantics = [#tpu.dimension_semantics<arbitrary>], iteration_bounds = array<i64: 1>, scalar_prefetch = 0 : i64, scratch_operands = 0 : i64, tpu.core_type = #tpu.core_type<tc>, window_params = [{pipeline_mode = #tpu.pipeline_mode<synchronous>, transform_indices = @transform_0, window_bounds = array<i64: 2, 128>}, {pipeline_mode = #tpu.pipeline_mode<synchronous>, transform_indices = @transform_1, window_bounds = array<i64: 128, 8>}, {pipeline_mode = #tpu.pipeline_mode<synchronous>, transform_indices = @transform_2, window_bounds = array<i64: 128, 8>}, {pipeline_mode = #tpu.pipeline_mode<synchronous>, transform_indices = @transform_3, window_bounds = array<i64: 8, 128>}, {pipeline_mode = #tpu.pipeline_mode<synchronous>, transform_indices = @transform_4, window_bounds = array<i64: 2, 128>}]} {
    %c0 = arith.constant 0 : index
    %c0_0 = arith.constant 0 : index
    %0 = vector.load %arg1[%c0, %c0_0] : memref<2x128xf32, #tpu.memory_space<vmem>>, vector<1x128xf32>
    %c1 = arith.constant 1 : index
    %c0_1 = arith.constant 0 : index
    %1 = vector.load %arg1[%c1, %c0_1] : memref<2x128xf32, #tpu.memory_space<vmem>>, vector<1x128xf32>
    %c0_2 = arith.constant 0 : index
    %c0_3 = arith.constant 0 : index
    %2 = vector.load %arg2[%c0_2, %c0_3] : memref<128x8xf32, #tpu.memory_space<vmem>>, vector<128x8xf32>
    %c0_4 = arith.constant 0 : index
    %c0_5 = arith.constant 0 : index
    %3 = vector.load %arg3[%c0_4, %c0_5] : memref<128x8xf32, #tpu.memory_space<vmem>>, vector<128x8xf32>
    %c0_6 = arith.constant 0 : index
    %c0_7 = arith.constant 0 : index
    %4 = vector.load %arg4[%c0_6, %c0_7] : memref<8x128xf32, #tpu.memory_space<vmem>>, vector<8x128xf32>
    %cst = arith.constant 1.000000e+00 : f32
    %5 = vector.broadcast %cst : f32 to vector<1x128xf32>
    %cst_8 = arith.constant 0.000000e+00 : f32
    %6 = vector.broadcast %cst_8 : f32 to vector<4x128xf32>
    %cst_9 = arith.constant 1.000000e+00 : f32
    %7 = vector.broadcast %cst_9 : f32 to vector<1x1xf32>
    %c0_i32 = arith.constant 0 : i32
    %c10_i32 = arith.constant 10 : i32
    %8 = arith.addi %c0_i32, %c10_i32 : i32
    %c1_i32 = arith.constant 1 : i32
    %9:2 = scf.for %arg6 = %c0_i32 to %8 step %c1_i32 iter_args(%arg7 = %0, %arg8 = %1) -> (vector<1x128xf32>, vector<1x128xf32>)  : i32 {
      %c16_i32 = arith.constant 16 : i32
      %12 = tpu.dynamic_rotate %arg7 by %c16_i32 dim 1 : vector<1x128xf32>, i32 -> vector<1x128xf32>
      %c32_i32 = arith.constant 32 : i32
      %13 = tpu.dynamic_rotate %arg7 by %c32_i32 dim 1 : vector<1x128xf32>, i32 -> vector<1x128xf32>
      %c48_i32 = arith.constant 48 : i32
      %14 = tpu.dynamic_rotate %arg7 by %c48_i32 dim 1 : vector<1x128xf32>, i32 -> vector<1x128xf32>
      %c64_i32 = arith.constant 64 : i32
      %15 = tpu.dynamic_rotate %arg7 by %c64_i32 dim 1 : vector<1x128xf32>, i32 -> vector<1x128xf32>
      %c80_i32 = arith.constant 80 : i32
      %16 = tpu.dynamic_rotate %arg7 by %c80_i32 dim 1 : vector<1x128xf32>, i32 -> vector<1x128xf32>
      %c96_i32 = arith.constant 96 : i32
      %17 = tpu.dynamic_rotate %arg7 by %c96_i32 dim 1 : vector<1x128xf32>, i32 -> vector<1x128xf32>
      %c112_i32 = arith.constant 112 : i32
      %18 = tpu.dynamic_rotate %arg7 by %c112_i32 dim 1 : vector<1x128xf32>, i32 -> vector<1x128xf32>
      %19 = tpu.concatenate %12, %13, %14, %15, %16, %17, %18 in 0 : vector<1x128xf32>, vector<1x128xf32>, vector<1x128xf32>, vector<1x128xf32>, vector<1x128xf32>, vector<1x128xf32>, vector<1x128xf32> -> vector<7x128xf32>
      %c16_i32_12 = arith.constant 16 : i32
      %20 = tpu.dynamic_rotate %arg8 by %c16_i32_12 dim 1 : vector<1x128xf32>, i32 -> vector<1x128xf32>
      %c32_i32_13 = arith.constant 32 : i32
      %21 = tpu.dynamic_rotate %arg8 by %c32_i32_13 dim 1 : vector<1x128xf32>, i32 -> vector<1x128xf32>
      %c48_i32_14 = arith.constant 48 : i32
      %22 = tpu.dynamic_rotate %arg8 by %c48_i32_14 dim 1 : vector<1x128xf32>, i32 -> vector<1x128xf32>
      %c64_i32_15 = arith.constant 64 : i32
      %23 = tpu.dynamic_rotate %arg8 by %c64_i32_15 dim 1 : vector<1x128xf32>, i32 -> vector<1x128xf32>
      %c80_i32_16 = arith.constant 80 : i32
      %24 = tpu.dynamic_rotate %arg8 by %c80_i32_16 dim 1 : vector<1x128xf32>, i32 -> vector<1x128xf32>
      %c96_i32_17 = arith.constant 96 : i32
      %25 = tpu.dynamic_rotate %arg8 by %c96_i32_17 dim 1 : vector<1x128xf32>, i32 -> vector<1x128xf32>
      %c112_i32_18 = arith.constant 112 : i32
      %26 = tpu.dynamic_rotate %arg8 by %c112_i32_18 dim 1 : vector<1x128xf32>, i32 -> vector<1x128xf32>
      %27 = tpu.concatenate %20, %21, %22, %23, %24, %25, %26 in 0 : vector<1x128xf32>, vector<1x128xf32>, vector<1x128xf32>, vector<1x128xf32>, vector<1x128xf32>, vector<1x128xf32>, vector<1x128xf32> -> vector<7x128xf32>
      %28 = vector.broadcast %arg7 : vector<1x128xf32> to vector<7x128xf32>
      %29 = arith.subf %28, %19 : vector<7x128xf32>
      %30 = vector.broadcast %arg8 : vector<1x128xf32> to vector<7x128xf32>
      %31 = arith.subf %30, %27 : vector<7x128xf32>
      %32 = arith.mulf %29, %29 : vector<7x128xf32>
      %33 = arith.mulf %31, %31 : vector<7x128xf32>
      %34 = arith.addf %32, %33 : vector<7x128xf32>
      %cst_19 = arith.constant 3.600000e+01 : f32
      %35 = vector.broadcast %cst_19 : f32 to vector<7x128xf32>
      %36 = arith.cmpf olt, %34, %35 : vector<7x128xf32>
      %37 = arith.extui %36 : vector<7x128xi1> to vector<7x128xi32>
      %38 = arith.sitofp %37 : vector<7x128xi32> to vector<7x128xf32>
      %39 = vector.shape_cast %38 : vector<7x128xf32> to vector<1x7x128xf32>
      %cst_20 = arith.constant dense<0.000000e+00> : vector<1xf32>
      %40 = vector.multi_reduction <add>, %39, %cst_20 [1, 2] : vector<1x7x128xf32> to vector<1xf32>
      %41 = vector.shape_cast %40 : vector<1xf32> to vector<1x1x1xf32>
      %42 = vector.extract %41[0, 0, 0] : f32 from vector<1x1x1xf32>
      %cst_21 = arith.constant 0.000000e+00 : f32
      %43 = vector.broadcast %cst_21 : f32 to vector<7x128xf32>
      %44 = arith.cmpf ogt, %34, %43 : vector<7x128xf32>
      %45 = arith.andi %36, %44 : vector<7x128xi1>
      %46 = math.rsqrt %34 : vector<7x128xf32>
      %cst_22 = arith.constant -0.333333343 : f32
      %47 = vector.broadcast %cst_22 : f32 to vector<7x128xf32>
      %48 = arith.mulf %47, %46 : vector<7x128xf32>
      %cst_23 = arith.constant 0.000000e+00 : f32
      %49 = vector.broadcast %cst_23 : f32 to vector<7x128xf32>
      %50 = arith.select %45, %48, %49 : vector<7x128xi1>, vector<7x128xf32>
      %51 = arith.mulf %50, %29 : vector<7x128xf32>
      %cst_24 = arith.constant dense<0.000000e+00> : vector<128xf32>
      %52 = vector.multi_reduction <add>, %51, %cst_24 [0] : vector<7x128xf32> to vector<128xf32>
      %53 = vector.shape_cast %52 : vector<128xf32> to vector<1x128xf32>
      %54 = arith.mulf %50, %31 : vector<7x128xf32>
      %cst_25 = arith.constant dense<0.000000e+00> : vector<128xf32>
      %55 = vector.multi_reduction <add>, %54, %cst_25 [0] : vector<7x128xf32> to vector<128xf32>
      %56 = vector.shape_cast %55 : vector<128xf32> to vector<1x128xf32>
      %57 = arith.mulf %arg7, %arg7 : vector<1x128xf32>
      %58 = arith.mulf %arg8, %arg8 : vector<1x128xf32>
      %59 = arith.addf %57, %58 : vector<1x128xf32>
      %60 = tpu.concatenate %arg7, %arg8, %5, %59, %6 in 0 : vector<1x128xf32>, vector<1x128xf32>, vector<1x128xf32>, vector<1x128xf32>, vector<4x128xf32> -> vector<8x128xf32>
      %cst_26 = arith.constant dense<0.000000e+00> : vector<128x128xf32>
      %61 = tpu.matmul %2, %60, %cst_26 {dimension_numbers = #tpu.dot_dimension_numbers<[1], [0], [0], [1], [0, 0, 1, 1], [], []>} : vector<128x8xf32>, vector<8x128xf32>, vector<128x128xf32> -> vector<128x128xf32>
      %cst_27 = arith.constant dense<0.000000e+00> : vector<128x128xf32>
      %62 = tpu.matmul %3, %60, %cst_27 {dimension_numbers = #tpu.dot_dimension_numbers<[1], [0], [0], [1], [0, 0, 1, 1], [], []>} : vector<128x8xf32>, vector<8x128xf32>, vector<128x128xf32> -> vector<128x128xf32>
      %cst_28 = arith.constant dense<0x7F800000> : vector<128xf32>
      %63 = vector.multi_reduction <minimumf>, %61, %cst_28 [0] : vector<128x128xf32> to vector<128xf32>
      %64 = vector.shape_cast %63 : vector<128xf32> to vector<1x128xf32>
      %cst_29 = arith.constant 0.000000e+00 : f32
      %65 = vector.broadcast %cst_29 : f32 to vector<128x128xf32>
      %66 = arith.cmpf oge, %62, %65 : vector<128x128xf32>
      %67 = vector.broadcast %64 : vector<1x128xf32> to vector<128x128xf32>
      %68 = arith.cmpf ole, %61, %67 : vector<128x128xf32>
      %cst_30 = arith.constant 1.000000e+00 : f32
      %69 = vector.broadcast %cst_30 : f32 to vector<128x128xf32>
      %70 = arith.cmpf olt, %61, %69 : vector<128x128xf32>
      %71 = arith.ori %66, %70 : vector<128x128xi1>
      %72 = arith.andi %68, %71 : vector<128x128xi1>
      %cst_31 = arith.constant 1.000000e+00 : f32
      %cst_32 = arith.constant -1.000000e+00 : f32
      %73 = vector.broadcast %cst_31 : f32 to vector<128x128xf32>
      %74 = vector.broadcast %cst_32 : f32 to vector<128x128xf32>
      %75 = arith.select %66, %73, %74 : vector<128x128xi1>, vector<128x128xf32>
      %cst_33 = arith.constant 0.000000e+00 : f32
      %76 = vector.broadcast %cst_33 : f32 to vector<128x128xf32>
      %77 = arith.select %72, %75, %76 : vector<128x128xi1>, vector<128x128xf32>
      %cst_34 = arith.constant dense<0.000000e+00> : vector<8x128xf32>
      %78 = tpu.matmul %4, %77, %cst_34 {dimension_numbers = #tpu.dot_dimension_numbers<[1], [0], [0], [1], [0, 0, 1, 1], [], []>} : vector<8x128xf32>, vector<128x128xf32>, vector<8x128xf32> -> vector<8x128xf32>
      %79 = vector.extract_strided_slice %78 {offsets = [0, 0], sizes = [1, 128], strides = [1, 1]} : vector<8x128xf32> to vector<1x128xf32>
      %80 = vector.extract_strided_slice %78 {offsets = [1, 0], sizes = [1, 128], strides = [1, 1]} : vector<8x128xf32> to vector<1x128xf32>
      %81 = vector.extract_strided_slice %78 {offsets = [2, 0], sizes = [1, 128], strides = [1, 1]} : vector<8x128xf32> to vector<1x128xf32>
      %cst_35 = arith.constant 0.000000e+00 : f32
      %82 = vector.broadcast %cst_35 : f32 to vector<1x128xf32>
      %83 = arith.cmpf ogt, %64, %82 : vector<1x128xf32>
      %84 = math.rsqrt %64 : vector<1x128xf32>
      %cst_36 = arith.constant 0.000000e+00 : f32
      %85 = vector.broadcast %cst_36 : f32 to vector<1x128xf32>
      %86 = arith.select %83, %84, %85 : vector<1x128xi1>, vector<1x128xf32>
      %87 = arith.mulf %arg7, %81 : vector<1x128xf32>
      %88 = arith.subf %87, %79 : vector<1x128xf32>
      %89 = arith.mulf %86, %88 : vector<1x128xf32>
      %90 = arith.mulf %arg8, %81 : vector<1x128xf32>
      %91 = arith.subf %90, %80 : vector<1x128xf32>
      %92 = arith.mulf %86, %91 : vector<1x128xf32>
      %cst_37 = arith.constant 1.000000e+00 : f32
      %93 = vector.broadcast %cst_37 : f32 to vector<1x128xf32>
      %94 = arith.cmpf olt, %64, %93 : vector<1x128xf32>
      %cst_38 = arith.constant 0.000000e+00 : f32
      %95 = vector.broadcast %cst_38 : f32 to vector<1x128xf32>
      %96 = arith.cmpf ogt, %81, %95 : vector<1x128xf32>
      %97 = arith.ori %94, %96 : vector<1x128xi1>
      %98 = arith.extui %97 : vector<1x128xi1> to vector<1x128xi32>
      %99 = arith.sitofp %98 : vector<1x128xi32> to vector<1x128xf32>
      %100 = vector.shape_cast %99 : vector<1x128xf32> to vector<1x1x128xf32>
      %cst_39 = arith.constant dense<0.000000e+00> : vector<1xf32>
      %101 = vector.multi_reduction <add>, %100, %cst_39 [1, 2] : vector<1x1x128xf32> to vector<1xf32>
      %102 = vector.shape_cast %101 : vector<1xf32> to vector<1x1x1xf32>
      %103 = vector.extract %102[0, 0, 0] : f32 from vector<1x1x1xf32>
      %cst_40 = arith.constant 9.99999997E-7 : f32
      %104 = arith.addf %42, %cst_40 : f32
      %105 = vector.broadcast %104 : f32 to vector<1x1xf32>
      %106 = arith.mulf %105, %7 : vector<1x1xf32>
      %107 = tpu.reciprocal %106 {approx = true} : vector<1x1xf32> -> vector<1x1xf32>
      %cst_41 = arith.constant 1.000000e+01 : f32
      %108 = vector.broadcast %cst_41 : f32 to vector<1x1xf32>
      %109 = arith.mulf %108, %107 : vector<1x1xf32>
      %cst_42 = arith.constant 9.99999997E-7 : f32
      %110 = arith.addf %103, %cst_42 : f32
      %111 = vector.broadcast %110 : f32 to vector<1x1xf32>
      %112 = arith.mulf %111, %7 : vector<1x1xf32>
      %113 = tpu.reciprocal %112 {approx = true} : vector<1x1xf32> -> vector<1x1xf32>
      %cst_43 = arith.constant 5.000000e+00 : f32
      %114 = vector.broadcast %cst_43 : f32 to vector<1x1xf32>
      %115 = arith.mulf %114, %113 : vector<1x1xf32>
      %116 = vector.broadcast %109 : vector<1x1xf32> to vector<1x128xf32>
      %117 = arith.mulf %116, %53 : vector<1x128xf32>
      %118 = vector.broadcast %115 : vector<1x1xf32> to vector<1x128xf32>
      %119 = arith.mulf %118, %89 : vector<1x128xf32>
      %120 = arith.addf %117, %119 : vector<1x128xf32>
      %121 = vector.broadcast %109 : vector<1x1xf32> to vector<1x128xf32>
      %122 = arith.mulf %121, %56 : vector<1x128xf32>
      %123 = vector.broadcast %115 : vector<1x1xf32> to vector<1x128xf32>
      %124 = arith.mulf %123, %92 : vector<1x128xf32>
      %125 = arith.addf %122, %124 : vector<1x128xf32>
      %cst_44 = arith.constant 5.000000e-01 : f32
      %126 = vector.broadcast %cst_44 : f32 to vector<1x128xf32>
      %127 = arith.mulf %126, %120 : vector<1x128xf32>
      %128 = arith.subf %arg7, %127 : vector<1x128xf32>
      %129 = arith.subf %128, %0 : vector<1x128xf32>
      %cst_45 = arith.constant -1.000000e-01 : f32
      %cst_46 = arith.constant 1.000000e-01 : f32
      %130 = vector.broadcast %cst_45 : f32 to vector<1x128xf32>
      %131 = arith.maximumf %130, %129 : vector<1x128xf32>
      %132 = vector.broadcast %cst_46 : f32 to vector<1x128xf32>
      %133 = arith.minimumf %132, %131 : vector<1x128xf32>
      %134 = arith.addf %0, %133 : vector<1x128xf32>
      %cst_47 = arith.constant 5.000000e-01 : f32
      %135 = vector.broadcast %cst_47 : f32 to vector<1x128xf32>
      %136 = arith.mulf %135, %125 : vector<1x128xf32>
      %137 = arith.subf %arg8, %136 : vector<1x128xf32>
      %138 = arith.subf %137, %1 : vector<1x128xf32>
      %cst_48 = arith.constant -1.000000e-01 : f32
      %cst_49 = arith.constant 1.000000e-01 : f32
      %139 = vector.broadcast %cst_48 : f32 to vector<1x128xf32>
      %140 = arith.maximumf %139, %138 : vector<1x128xf32>
      %141 = vector.broadcast %cst_49 : f32 to vector<1x128xf32>
      %142 = arith.minimumf %141, %140 : vector<1x128xf32>
      %143 = arith.addf %1, %142 : vector<1x128xf32>
      scf.yield %134, %143 : vector<1x128xf32>, vector<1x128xf32>
    }
    %10 = tpu.concatenate %9#0, %9#1 in 0 : vector<1x128xf32>, vector<1x128xf32> -> vector<2x128xf32>
    %c0_10 = arith.constant 0 : index
    %c0_11 = arith.constant 0 : index
    %11 = vector.load %arg5[%c0_10, %c0_11] : memref<2x128xf32, #tpu.memory_space<vmem>>, vector<2x128xf32>
    tpu.vector_store %arg5[%c0_10, %c0_11], %10 {strides = array<i32>} : memref<2x128xf32, #tpu.memory_space<vmem>>, vector<2x128xf32>,
    return
  }
  func.func @transform_0(%arg0: i32) -> (i32, i32) {
    %c0_i32 = arith.constant 0 : i32
    %c0_i32_0 = arith.constant 0 : i32
    %c0_i32_1 = arith.constant 0 : i32
    return %c0_i32, %c0_i32_0 : i32, i32
  }
  func.func @transform_1(%arg0: i32) -> (i32, i32) {
    %c0_i32 = arith.constant 0 : i32
    %c0_i32_0 = arith.constant 0 : i32
    %c0_i32_1 = arith.constant 0 : i32
    return %c0_i32, %c0_i32_0 : i32, i32
  }
  func.func @transform_2(%arg0: i32) -> (i32, i32) {
    %c0_i32 = arith.constant 0 : i32
    %c0_i32_0 = arith.constant 0 : i32
    %c0_i32_1 = arith.constant 0 : i32
    return %c0_i32, %c0_i32_0 : i32, i32
  }
  func.func @transform_3(%arg0: i32) -> (i32, i32) {
    %c0_i32 = arith.constant 0 : i32
    %c0_i32_0 = arith.constant 0 : i32
    %c0_i32_1 = arith.constant 0 : i32
    return %c0_i32, %c0_i32_0 : i32, i32
  }
  func.func @transform_4(%arg0: i32) -> (i32, i32) {
    %c0_i32 = arith.constant 0 : i32
    %c0_i32_0 = arith.constant 0 : i32
    %c0_i32_1 = arith.constant 0 : i32
    return %c0_i32, %c0_i32_0 : i32, i32
  }
}

</mosaic_0001>

<llo_original>
// kernel: tpu_custom_call.1
$region0: #{tpu_custom_call.1}
  #allocation0 [shape = 'u32[]', space=smem, size = 0x4, offset = 0x4, fixed_abs, tag = 'smem constant byte address 0x4 - core index']
  #allocation1 [shape = 'u32[144,128]{1,0:T(1,128)}', space=vmem, size = 0x12000, scoped, tag = 'internal scratch']
  %s0 = inlined_call_operand.vmem [shape: f32[2,128], index: 0, kind: input, shape index: {}]
  %s1 = inlined_call_operand.vmem [shape: f32[128,8], index: 1, kind: input, shape index: {}]
  %s2 = inlined_call_operand.vmem [shape: f32[128,8], index: 2, kind: input, shape index: {}]
  %s3 = inlined_call_operand.vmem [shape: f32[8,128], index: 3, kind: input, shape index: {}]
  %s4 = inlined_call_operand.hbm [shape: f32[2,128], index: 4, kind: output, shape index: {}]
  %s5 = sld [smem:[#allocation0]]
  $region33: #{tpu_custom_call.1} parent=0
    _
  %s7 = ssub.s32 1, %s5
  %s8 = scalar_select 0, %s7, %s5
  $region1: #{tpu_custom_call.1} parent=0
    #allocation2 [shape = 'u8[1024]{0}', space=vmem, size = 0x400, scoped, tag = 'output window, operand 0, single buffered']
    #allocation3 [shape = 's32[1]{0}', space=sflag, size = 0x4, scoped, tag = 'scoped memory for tpu_custom_call.1']
    %9 = vsyncpa [#allocation3], 0
    // Predicated region
    $region2: #{tpu_custom_call.1} parent=1 // pred_check
      _
    $region3: #{tpu_custom_call.1} parent=1 // pred_check_branch
      %11 = sbr.rel (0) target = $region5
    $region4: #{tpu_custom_call.1} parent=1 // pred_region
      _
    $region5: #{tpu_custom_call.1} parent=1 // pred_fallthru
      _
    // Predicated region
    $region6: #{tpu_custom_call.1} parent=1 // pred_check
      _
    $region7: #{tpu_custom_call.1} parent=1 // pred_check_branch
      %13 = sbr.rel (0) target = $region9
    $region8: #{tpu_custom_call.1} parent=1 // pred_region
      _
    $region9: #{tpu_custom_call.1} parent=1 // pred_fallthru
      _
    // Predicated region
    $region10: #{tpu_custom_call.1} parent=1 // pred_check
      _
    $region11: #{tpu_custom_call.1} parent=1 // pred_check_branch
      %15 = sbr.rel (0) target = $region13
    $region12: #{tpu_custom_call.1} parent=1 // pred_region
      _
    $region13: #{tpu_custom_call.1} parent=1 // pred_fallthru
      _
    // Predicated region
    $region14: #{tpu_custom_call.1} parent=1 // pred_check
      _
    $region15: #{tpu_custom_call.1} parent=1 // pred_check_branch
      %17 = sbr.rel (0) target = $region17
    $region16: #{tpu_custom_call.1} parent=1 // pred_region
      _
    $region17: #{tpu_custom_call.1} parent=1 // pred_fallthru
      _
    %v18 = vld [vmem:[%s0] sm:$0x1]
    %v19 = vld [vmem:[%s0 + $0x1] sm:$0x1]
    %v20 = vld [vmem:[%s1] sm:$0xff]
    %v21 = vld [vmem:[%s1 + $0x8] sm:$0xff]
    %v22 = vld [vmem:[%s1 + $0x10] sm:$0xff]
    %v23 = vld [vmem:[%s1 + $0x18] sm:$0xff]
    %v24 = vld [vmem:[%s1 + $0x20] sm:$0xff]
    %v25 = vld [vmem:[%s1 + $0x28] sm:$0xff]
    %v26 = vld [vmem:[%s1 + $0x30] sm:$0xff]
    %v27 = vld [vmem:[%s1 + $0x38] sm:$0xff]
    %v28 = vld [vmem:[%s1 + $0x40] sm:$0xff]
    %v29 = vld [vmem:[%s1 + $0x48] sm:$0xff]
    %v30 = vld [vmem:[%s1 + $0x50] sm:$0xff]
    %v31 = vld [vmem:[%s1 + $0x58] sm:$0xff]
    %v32 = vld [vmem:[%s1 + $0x60] sm:$0xff]
    %v33 = vld [vmem:[%s1 + $0x68] sm:$0xff]
    %v34 = vld [vmem:[%s1 + $0x70] sm:$0xff]
    %v35 = vld [vmem:[%s1 + $0x78] sm:$0xff]
    %v36 = vld [vmem:[%s2] sm:$0xff]
    %v37 = vld [vmem:[%s2 + $0x8] sm:$0xff]
    %v38 = vld [vmem:[%s2 + $0x10] sm:$0xff]
    %v39 = vld [vmem:[%s2 + $0x18] sm:$0xff]
    %v40 = vld [vmem:[%s2 + $0x20] sm:$0xff]
    %v41 = vld [vmem:[%s2 + $0x28] sm:$0xff]
    %v42 = vld [vmem:[%s2 + $0x30] sm:$0xff]
    %v43 = vld [vmem:[%s2 + $0x38] sm:$0xff]
    %v44 = vld [vmem:[%s2 + $0x40] sm:$0xff]
    %v45 = vld [vmem:[%s2 + $0x48] sm:$0xff]
    %v46 = vld [vmem:[%s2 + $0x50] sm:$0xff]
    %v47 = vld [vmem:[%s2 + $0x58] sm:$0xff]
    %v48 = vld [vmem:[%s2 + $0x60] sm:$0xff]
    %v49 = vld [vmem:[%s2 + $0x68] sm:$0xff]
    %v50 = vld [vmem:[%s2 + $0x70] sm:$0xff]
    %v51 = vld [vmem:[%s2 + $0x78] sm:$0xff]
    %v52 = vld [vmem:[%s3] sm:$0xff]
    loop: start=0, step=1, limit=10
    $region18: #{tpu_custom_call.1} parent=1 // loop_pre_header
      _
    $region19: #{tpu_custom_call.1} parent=1 // loop_header
      %s54 = sphi 0, %s58
      %p55 = scmp.ge.s32.totalorder %s54, 10
      %v59 = vphi %v18, %v845
      %v60 = vphi %v19, %v851
    $region20: #{tpu_custom_call.1} parent=1 // loop_header_branch
      %57 = sbr.rel (%p55) target = $region24
    $region21: #{tpu_custom_call.1} parent=1 // loop_body
      %61 = vrot.lane.b32.xlu0 %v59, 16
      %v62 = vpop.permute.xlu0 %61
      %63 = vrot.lane.b32.xlu0 %v59, 32
      %v64 = vpop.permute.xlu0 %63
      %65 = vrot.lane.b32.xlu0 %v59, 48
      %v66 = vpop.permute.xlu0 %65
      %67 = vrot.lane.b32.xlu0 %v59, 64
      %v68 = vpop.permute.xlu0 %67
      %69 = vrot.lane.b32.xlu0 %v59, 80
      %v70 = vpop.permute.xlu0 %69
      %71 = vrot.lane.b32.xlu0 %v59, 96
      %v72 = vpop.permute.xlu0 %71
      %73 = vrot.lane.b32.xlu0 %v59, 112
      %v74 = vpop.permute.xlu0 %73
      %v76 = vrot.slane %v64, 7
      %v79 = vrot.slane %v66, 6
      %v82 = vrot.slane %v68, 5
      %v85 = vrot.slane %v70, 4
      %v88 = vrot.slane %v72, 3
      %v91 = vrot.slane %v74, 2
      %vm93 = vcmask 1040384
      %v94 = vsel %vm93, %v62, %v76
      %vm95 = vcmask 1041408
      %v96 = vsel %vm95, %v94, %v79
      %vm97 = vcmask 1042432
      %v98 = vsel %vm97, %v96, %v82
      %vm99 = vcmask 1043456
      %v100 = vsel %vm99, %v98, %v85
      %vm101 = vcmask 1044480
      %v102 = vsel %vm101, %v100, %v88
      %vm103 = vcmask 1045504
      %v104 = vsel %vm103, %v102, %v91
      %105 = vrot.lane.b32.xlu0 %v60, 16
      %v106 = vpop.permute.xlu0 %105
      %107 = vrot.lane.b32.xlu0 %v60, 32
      %v108 = vpop.permute.xlu0 %107
      %109 = vrot.lane.b32.xlu0 %v60, 48
      %v110 = vpop.permute.xlu0 %109
      %111 = vrot.lane.b32.xlu0 %v60, 64
      %v112 = vpop.permute.xlu0 %111
      %113 = vrot.lane.b32.xlu0 %v60, 80
      %v114 = vpop.permute.xlu0 %113
      %115 = vrot.lane.b32.xlu0 %v60, 96
      %v116 = vpop.permute.xlu0 %115
      %117 = vrot.lane.b32.xlu0 %v60, 112
      %v118 = vpop.permute.xlu0 %117
      %v120 = vrot.slane %v108, 7
      %v123 = vrot.slane %v110, 6
      %v126 = vrot.slane %v112, 5
      %v129 = vrot.slane %v114, 4
      %v132 = vrot.slane %v116, 3
      %v135 = vrot.slane %v118, 2
      %v137 = vsel %vm93, %v106, %v120
      %v138 = vsel %vm95, %v137, %v123
      %v139 = vsel %vm97, %v138, %v126
      %v140 = vsel %vm99, %v139, %v129
      %v141 = vsel %vm101, %v140, %v132
      %v142 = vsel %vm103, %v141, %v135
      %v143 = vlaneseq
      %v144 = vshrl.u32 %v143, 7
      %v145 = vsub.s32 0, %v144
      %v146 = vrot.slane %v59, %v145
      %v147 = vsub.f32 %v146, %v104
      %v148 = vlaneseq
      %v149 = vshrl.u32 %v148, 7
      %v150 = vsub.s32 0, %v149
      %v151 = vrot.slane %v60, %v150
      %v152 = vsub.f32 %v151, %v142
      %v153 = vmul.f32 %v147, %v147
      %v154 = vmul.f32 %v152, %v152
      %v155 = vadd.f32 %v153, %v154
      %vm156 = vcmp.lt.f32.partialorder %v155, 36.0
      %v157 = vsel %vm156, 1, 0
      %v158 = vcvt.s32.f32 %v157
      %vm159 = vcmask 1046528
      %v160 = vsel %vm159, %v158, 0.0
      %161 = vadd.xlane.f32.xlu0 %v160
      %v162 = vpop.xlane.xlu0 %161
      %v163 = vrot.slane %v162, 4
      %v164 = vadd.f32 %v162, %v163
      %v165 = vrot.slane %v164, 2
      %v166 = vadd.f32 %v164, %v165
      %v167 = vrot.slane %v166, 1
      %v168 = vadd.f32 %v166, %v167
      %s169 = vtos %v168
      %vm170 = vcmp.gt.f32.partialorder %v155, 0.0
      %vm171 = vmand %vm156, %vm170
      %v172 = vrsqrt.pop %v155
      %v173 = vmul.f32 %v172, -0.33333334
      %v174 = vsel %vm171, %v173, 0.0
      %v175 = vmul.f32 %v174, %v147
      %v176 = vsel %vm159, %v175, 0.0
      %v177 = vrot.slane %v176, 4
      %v178 = vadd.f32 %v176, %v177
      %v179 = vrot.slane %v178, 2
      %v180 = vadd.f32 %v178, %v179
      %v181 = vrot.slane %v180, 1
      %v182 = vadd.f32 %v180, %v181
      %v183 = vmul.f32 %v174, %v152
      %v184 = vsel %vm159, %v183, 0.0
      %v185 = vrot.slane %v184, 4
      %v186 = vadd.f32 %v184, %v185
      %v187 = vrot.slane %v186, 2
      %v188 = vadd.f32 %v186, %v187
      %v189 = vrot.slane %v188, 1
      %v190 = vadd.f32 %v188, %v189
      %v191 = vmul.f32 %v59, %v59
      %v192 = vmul.f32 %v60, %v60
      %v193 = vadd.f32 %v191, %v192
      %v195 = vrot.slane %v60, 7
      %v198 = vrot.slane %v193, 5
      %v200 = vsel %vm93, %v59, %v195
      %v201 = vsel %vm95, %v200, 1.0
      %v202 = vsel %vm97, %v201, %v198
      %v203 = vsel %vm99, %v202, 0.0
      %vm204 = vcmask 64512
      %v206 = vsel %vm204, %v20, 0
      %v209 = vsel %vm204, %v21, 0
      %v212 = vsel %vm204, %v22, 0
      %v215 = vsel %vm204, %v23, 0
      %v218 = vsel %vm204, %v24, 0
      %v221 = vsel %vm204, %v25, 0
      %v224 = vsel %vm204, %v26, 0
      %v227 = vsel %vm204, %v27, 0
      %v230 = vsel %vm204, %v28, 0
      %v233 = vsel %vm204, %v29, 0
      %v236 = vsel %vm204, %v30, 0
      %v239 = vsel %vm204, %v31, 0
      %v242 = vsel %vm204, %v32, 0
      %v245 = vsel %vm204, %v33, 0
      %v248 = vsel %vm204, %v34, 0
      %v251 = vsel %vm204, %v35, 0
      %253 = vmatprep.subr.mxu0 0.0
      %254 = vmatpush1.msra.mxu0 %v203
      %255 = vmatprep.subr.mxu0 0.0
      %256 = vmatpush1.msra.mxu0 0.0
      %257 = vmatprep.subr.mxu0 0.0
      %258 = vmatpush1.msra.mxu0 0.0
      %259 = vmatprep.subr.mxu0 0.0
      %260 = vmatpush1.msra.mxu0 0.0
      %261 = vmatprep.subr.mxu0 0.0
      %262 = vmatpush1.msra.mxu0 0.0
      %263 = vmatprep.subr.mxu0 0.0
      %264 = vmatpush1.msra.mxu0 0.0
      %265 = vmatprep.subr.mxu0 0.0
      %266 = vmatpush1.msra.mxu0 0.0
      %267 = vmatprep.subr.mxu0 0.0
      %268 = vmatpush1.msra.mxu0 0.0
      %269 = vmatprep.subr.mxu0 0.0
      %270 = vmatpush1.msra.mxu0 0.0
      %271 = vmatprep.subr.mxu0 0.0
      %272 = vmatpush1.msra.mxu0 0.0
      %273 = vmatprep.subr.mxu0 0.0
      %274 = vmatpush1.msra.mxu0 0.0
      %275 = vmatprep.subr.mxu0 0.0
      %276 = vmatpush1.msra.mxu0 0.0
      %277 = vmatprep.subr.mxu0 0.0
      %278 = vmatpush1.msra.mxu0 0.0
      %279 = vmatprep.subr.mxu0 0.0
      %280 = vmatpush1.msra.mxu0 0.0
      %281 = vmatprep.subr.mxu0 0.0
      %282 = vmatpush1.msra.mxu0 0.0
      %283 = vmatprep.subr.mxu0 0.0
      %284 = vmatpush1.msra.mxu0 0.0
      %285 = vmatprep.subr.mxu0 0.0
      %286 = vmatpush1.msra.mxu0 0.0
      %287 = vmatprep.subr.mxu0 0.0
      %288 = vmatpush1.msra.mxu0 0.0
      %289 = vmatprep.subr.mxu0 0.0
      %290 = vmatpush1.msra.mxu0 0.0
      %291 = vmatprep.subr.mxu0 0.0
      %292 = vmatpush1.msra.mxu0 0.0
      %293 = vmatprep.subr.mxu0 0.0
      %294 = vmatpush1.msra.mxu0 0.0
      %295 = vmatprep.subr.mxu0 0.0
      %296 = vmatpush1.msra.mxu0 0.0
      %297 = vmatprep.subr.mxu0 0.0
      %298 = vmatpush1.msra.mxu0 0.0
      %299 = vmatprep.subr.mxu0 0.0
      %300 = vmatpush1.msra.mxu0 0.0
      %301 = vmatprep.subr.mxu0 0.0
      %302 = vmatpush1.msra.mxu0 0.0
      %303 = vmatprep.subr.mxu0 0.0
      %304 = vmatpush1.msra.mxu0 0.0
      %305 = vmatprep.subr.mxu0 0.0
      %306 = vmatpush1.msra.mxu0 0.0
      %307 = vmatprep.subr.mxu0 0.0
      %308 = vmatpush1.msra.mxu0 0.0
      %309 = vmatprep.subr.mxu0 0.0
      %310 = vmatpush1.msra.mxu0 0.0
      %311 = vmatprep.subr.mxu0 0.0
      %312 = vmatpush1.msra.mxu0 0.0
      %313 = vmatprep.subr.mxu0 0.0
      %314 = vmatpush1.msra.mxu0 0.0
      %315 = vmatprep.subr.mxu0 0.0
      %316 = vmatpush1.msra.mxu0 0.0
      %317 = vmatprep.mubr.f32.mxu0 0.0
      %318 = vmatmul.mubr.f32.gmra.mrb[0].mxu0 %v206
      %v319 = vpop.f32.mrb[0].mxu0
      %v320 = vadd.f32 0.0, %v319
      %v321 = vpop.f32.mrb[0].mxu0
      %322 = vmatprep.mubr.f32.mxu0 0.0
      %323 = vmatmul.mubr.f32.gmra.mrb[0].mxu0 %v209
      %v324 = vpop.f32.mrb[0].mxu0
      %v325 = vadd.f32 0.0, %v324
      %v326 = vpop.f32.mrb[0].mxu0
      %327 = vmatprep.mubr.f32.mxu0 0.0
      %328 = vmatmul.mubr.f32.gmra.mrb[0].mxu0 %v212
      %v329 = vpop.f32.mrb[0].mxu0
      %v330 = vadd.f32 0.0, %v329
      %v331 = vpop.f32.mrb[0].mxu0
      %332 = vmatprep.mubr.f32.mxu0 0.0
      %333 = vmatmul.mubr.f32.gmra.mrb[0].mxu0 %v215
      %v334 = vpop.f32.mrb[0].mxu0
      %v335 = vadd.f32 0.0, %v334
      %v336 = vpop.f32.mrb[0].mxu0
      %337 = vmatprep.mubr.f32.mxu0 0.0
      %338 = vmatmul.mubr.f32.gmra.mrb[0].mxu0 %v218
      %v339 = vpop.f32.mrb[0].mxu0
      %v340 = vadd.f32 0.0, %v339
      %v341 = vpop.f32.mrb[0].mxu0
      %342 = vmatprep.mubr.f32.mxu0 0.0
      %343 = vmatmul.mubr.f32.gmra.mrb[0].mxu0 %v221
      %v344 = vpop.f32.mrb[0].mxu0
      %v345 = vadd.f32 0.0, %v344
      %v346 = vpop.f32.mrb[0].mxu0
      %347 = vmatprep.mubr.f32.mxu0 0.0
      %348 = vmatmul.mubr.f32.gmra.mrb[0].mxu0 %v224
      %v349 = vpop.f32.mrb[0].mxu0
      %v350 = vadd.f32 0.0, %v349
      %v351 = vpop.f32.mrb[0].mxu0
      %352 = vmatprep.mubr.f32.mxu0 0.0
      %353 = vmatmul.mubr.f32.gmra.mrb[0].mxu0 %v227
      %v354 = vpop.f32.mrb[0].mxu0
      %v355 = vadd.f32 0.0, %v354
      %v356 = vpop.f32.mrb[0].mxu0
      %357 = vmatprep.mubr.f32.mxu0 0.0
      %358 = vmatmul.mubr.f32.gmra.mrb[0].mxu0 %v230
      %v359 = vpop.f32.mrb[0].mxu0
      %v360 = vadd.f32 0.0, %v359
      %v361 = vpop.f32.mrb[0].mxu0
      %362 = vmatprep.mubr.f32.mxu0 0.0
      %363 = vmatmul.mubr.f32.gmra.mrb[0].mxu0 %v233
      %v364 = vpop.f32.mrb[0].mxu0
      %v365 = vadd.f32 0.0, %v364
      %v366 = vpop.f32.mrb[0].mxu0
      %367 = vmatprep.mubr.f32.mxu0 0.0
      %368 = vmatmul.mubr.f32.gmra.mrb[0].mxu0 %v236
      %v369 = vpop.f32.mrb[0].mxu0
      %v370 = vadd.f32 0.0, %v369
      %v371 = vpop.f32.mrb[0].mxu0
      %372 = vmatprep.mubr.f32.mxu0 0.0
      %373 = vmatmul.mubr.f32.gmra.mrb[0].mxu0 %v239
      %v374 = vpop.f32.mrb[0].mxu0
      %v375 = vadd.f32 0.0, %v374
      %v376 = vpop.f32.mrb[0].mxu0
      %377 = vmatprep.mubr.f32.mxu0 0.0
      %378 = vmatmul.mubr.f32.gmra.mrb[0].mxu0 %v242
      %v379 = vpop.f32.mrb[0].mxu0
      %v380 = vadd.f32 0.0, %v379
      %v381 = vpop.f32.mrb[0].mxu0
      %382 = vmatprep.mubr.f32.mxu0 0.0
      %383 = vmatmul.mubr.f32.gmra.mrb[0].mxu0 %v245
      %v384 = vpop.f32.mrb[0].mxu0
      %v385 = vadd.f32 0.0, %v384
      %v386 = vpop.f32.mrb[0].mxu0
      %387 = vmatprep.mubr.f32.mxu0 0.0
      %388 = vmatmul.mubr.f32.gmra.mrb[0].mxu0 %v248
      %v389 = vpop.f32.mrb[0].mxu0
      %v390 = vadd.f32 0.0, %v389
      %v391 = vpop.f32.mrb[0].mxu0
      %392 = vmatprep.mubr.f32.mxu0 0.0
      %393 = vmatmul.mubr.f32.gmra.mrb[0].mxu0 %v251
      %v394 = vpop.f32.mrb[0].mxu0
      %v395 = vadd.f32 0.0, %v394
      %v396 = vpop.f32.mrb[0].mxu0
      %397 = vdwg.mxu0
      %v399 = vsel %vm204, %v36, 0
      %v402 = vsel %vm204, %v37, 0
      %v405 = vsel %vm204, %v38, 0
      %v408 = vsel %vm204, %v39, 0
      %v411 = vsel %vm204, %v40, 0
      %v414 = vsel %vm204, %v41, 0
      %v417 = vsel %vm204, %v42, 0
      %v420 = vsel %vm204, %v43, 0
      %v423 = vsel %vm204, %v44, 0
      %v426 = vsel %vm204, %v45, 0
      %v429 = vsel %vm204, %v46, 0
      %v432 = vsel %vm204, %v47, 0
      %v435 = vsel %vm204, %v48, 0
      %v438 = vsel %vm204, %v49, 0
      %v441 = vsel %vm204, %v50, 0
      %v444 = vsel %vm204, %v51, 0
      %446 = vmatprep.subr.mxu0 0.0
      %447 = vmatpush1.msra.mxu0 %v203
      %448 = vmatprep.subr.mxu0 0.0
      %449 = vmatpush1.msra.mxu0 0.0
      %450 = vmatprep.subr.mxu0 0.0
      %451 = vmatpush1.msra.mxu0 0.0
      %452 = vmatprep.subr.mxu0 0.0
      %453 = vmatpush1.msra.mxu0 0.0
      %454 = vmatprep.subr.mxu0 0.0
      %455 = vmatpush1.msra.mxu0 0.0
      %456 = vmatprep.subr.mxu0 0.0
      %457 = vmatpush1.msra.mxu0 0.0
      %458 = vmatprep.subr.mxu0 0.0
      %459 = vmatpush1.msra.mxu0 0.0
      %460 = vmatprep.subr.mxu0 0.0
      %461 = vmatpush1.msra.mxu0 0.0
      %462 = vmatprep.subr.mxu0 0.0
      %463 = vmatpush1.msra.mxu0 0.0
      %464 = vmatprep.subr.mxu0 0.0
      %465 = vmatpush1.msra.mxu0 0.0
      %466 = vmatprep.subr.mxu0 0.0
      %467 = vmatpush1.msra.mxu0 0.0
      %468 = vmatprep.subr.mxu0 0.0
      %469 = vmatpush1.msra.mxu0 0.0
      %470 = vmatprep.subr.mxu0 0.0
      %471 = vmatpush1.msra.mxu0 0.0
      %472 = vmatprep.subr.mxu0 0.0
      %473 = vmatpush1.msra.mxu0 0.0
      %474 = vmatprep.subr.mxu0 0.0
      %475 = vmatpush1.msra.mxu0 0.0
      %476 = vmatprep.subr.mxu0 0.0
      %477 = vmatpush1.msra.mxu0 0.0
      %478 = vmatprep.subr.mxu0 0.0
      %479 = vmatpush1.msra.mxu0 0.0
      %480 = vmatprep.subr.mxu0 0.0
      %481 = vmatpush1.msra.mxu0 0.0
      %482 = vmatprep.subr.mxu0 0.0
      %483 = vmatpush1.msra.mxu0 0.0
      %484 = vmatprep.subr.mxu0 0.0
      %485 = vmatpush1.msra.mxu0 0.0
      %486 = vmatprep.subr.mxu0 0.0
      %487 = vmatpush1.msra.mxu0 0.0
      %488 = vmatprep.subr.mxu0 0.0
      %489 = vmatpush1.msra.mxu0 0.0
      %490 = vmatprep.subr.mxu0 0.0
      %491 = vmatpush1.msra.mxu0 0.0
      %492 = vmatprep.subr.mxu0 0.0
      %493 = vmatpush1.msra.mxu0 0.0
      %494 = vmatprep.subr.mxu0 0.0
      %495 = vmatpush1.msra.mxu0 0.0
      %496 = vmatprep.subr.mxu0 0.0
      %497 = vmatpush1.msra.mxu0 0.0
      %498 = vmatprep.subr.mxu0 0.0
      %499 = vmatpush1.msra.mxu0 0.0
      %500 = vmatprep.subr.mxu0 0.0
      %501 = vmatpush1.msra.mxu0 0.0
      %502 = vmatprep.subr.mxu0 0.0
      %503 = vmatpush1.msra.mxu0 0.0
      %504 = vmatprep.subr.mxu0 0.0
      %505 = vmatpush1.msra.mxu0 0.0
      %506 = vmatprep.subr.mxu0 0.0
      %507 = vmatpush1.msra.mxu0 0.0
      %508 = vmatprep.subr.mxu0 0.0
      %509 = vmatpush1.msra.mxu0 0.0
      %510 = vmatprep.mubr.f32.mxu0 0.0
      %511 = vmatmul.mubr.f32.gmra.mrb[0].mxu0 %v399
      %v512 = vpop.f32.mrb[0].mxu0
      %v513 = vadd.f32 0.0, %v512
      %v514 = vpop.f32.mrb[0].mxu0
      %515 = vmatprep.mubr.f32.mxu0 0.0
      %516 = vmatmul.mubr.f32.gmra.mrb[0].mxu0 %v402
      %v517 = vpop.f32.mrb[0].mxu0
      %v518 = vadd.f32 0.0, %v517
      %v519 = vpop.f32.mrb[0].mxu0
      %520 = vmatprep.mubr.f32.mxu0 0.0
      %521 = vmatmul.mubr.f32.gmra.mrb[0].mxu0 %v405
      %v522 = vpop.f32.mrb[0].mxu0
      %v523 = vadd.f32 0.0, %v522
      %v524 = vpop.f32.mrb[0].mxu0
      %525 = vmatprep.mubr.f32.mxu0 0.0
      %526 = vmatmul.mubr.f32.gmra.mrb[0].mxu0 %v408
      %v527 = vpop.f32.mrb[0].mxu0
      %v528 = vadd.f32 0.0, %v527
      %v529 = vpop.f32.mrb[0].mxu0
      %530 = vmatprep.mubr.f32.mxu0 0.0
      %531 = vmatmul.mubr.f32.gmra.mrb[0].mxu0 %v411
      %v532 = vpop.f32.mrb[0].mxu0
      %v533 = vadd.f32 0.0, %v532
      %v534 = vpop.f32.mrb[0].mxu0
      %535 = vmatprep.mubr.f32.mxu0 0.0
      %536 = vmatmul.mubr.f32.gmra.mrb[0].mxu0 %v414
      %v537 = vpop.f32.mrb[0].mxu0
      %v538 = vadd.f32 0.0, %v537
      %v539 = vpop.f32.mrb[0].mxu0
      %540 = vmatprep.mubr.f32.mxu0 0.0
      %541 = vmatmul.mubr.f32.gmra.mrb[0].mxu0 %v417
      %v542 = vpop.f32.mrb[0].mxu0
      %v543 = vadd.f32 0.0, %v542
      %v544 = vpop.f32.mrb[0].mxu0
      %545 = vmatprep.mubr.f32.mxu0 0.0
      %546 = vmatmul.mubr.f32.gmra.mrb[0].mxu0 %v420
      %v547 = vpop.f32.mrb[0].mxu0
      %v548 = vadd.f32 0.0, %v547
      %v549 = vpop.f32.mrb[0].mxu0
      %550 = vmatprep.mubr.f32.mxu0 0.0
      %551 = vmatmul.mubr.f32.gmra.mrb[0].mxu0 %v423
      %v552 = vpop.f32.mrb[0].mxu0
      %v553 = vadd.f32 0.0, %v552
      %v554 = vpop.f32.mrb[0].mxu0
      %555 = vmatprep.mubr.f32.mxu0 0.0
      %556 = vmatmul.mubr.f32.gmra.mrb[0].mxu0 %v426
      %v557 = vpop.f32.mrb[0].mxu0
      %v558 = vadd.f32 0.0, %v557
      %v559 = vpop.f32.mrb[0].mxu0
      %560 = vmatprep.mubr.f32.mxu0 0.0
      %561 = vmatmul.mubr.f32.gmra.mrb[0].mxu0 %v429
      %v562 = vpop.f32.mrb[0].mxu0
      %v563 = vadd.f32 0.0, %v562
      %v564 = vpop.f32.mrb[0].mxu0
      %565 = vmatprep.mubr.f32.mxu0 0.0
      %566 = vmatmul.mubr.f32.gmra.mrb[0].mxu0 %v432
      %v567 = vpop.f32.mrb[0].mxu0
      %v568 = vadd.f32 0.0, %v567
      %v569 = vpop.f32.mrb[0].mxu0
      %570 = vmatprep.mubr.f32.mxu0 0.0
      %571 = vmatmul.mubr.f32.gmra.mrb[0].mxu0 %v435
      %v572 = vpop.f32.mrb[0].mxu0
      %v573 = vadd.f32 0.0, %v572
      %v574 = vpop.f32.mrb[0].mxu0
      %575 = vmatprep.mubr.f32.mxu0 0.0
      %576 = vmatmul.mubr.f32.gmra.mrb[0].mxu0 %v438
      %v577 = vpop.f32.mrb[0].mxu0
      %v578 = vadd.f32 0.0, %v577
      %v579 = vpop.f32.mrb[0].mxu0
      %580 = vmatprep.mubr.f32.mxu0 0.0
      %581 = vmatmul.mubr.f32.gmra.mrb[0].mxu0 %v441
      %v582 = vpop.f32.mrb[0].mxu0
      %v583 = vadd.f32 0.0, %v582
      %v584 = vpop.f32.mrb[0].mxu0
      %585 = vmatprep.mubr.f32.mxu0 0.0
      %586 = vmatmul.mubr.f32.gmra.mrb[0].mxu0 %v444
      %v587 = vpop.f32.mrb[0].mxu0
      %v588 = vadd.f32 0.0, %v587
      %v589 = vpop.f32.mrb[0].mxu0
      %590 = vdwg.mxu0
      %v591 = vmin.f32 %v320, %v340
      %v592 = vmin.f32 %v325, %v345
      %v593 = vmin.f32 %v330, %v350
      %v594 = vmin.f32 %v335, %v355
      %v595 = vmin.f32 %v591, %v360
      %v596 = vmin.f32 %v592, %v365
      %v597 = vmin.f32 %v593, %v370
      %v598 = vmin.f32 %v594, %v375
      %v599 = vmin.f32 %v595, %v380
      %v600 = vmin.f32 %v596, %v385
      %v601 = vmin.f32 %v597, %v390
      %v602 = vmin.f32 %v598, %v395
      %v603 = vmin.f32 %v599, %v600
      %v604 = vmin.f32 %v601, %v602
      %v605 = vmin.f32 %v603, %v604
      %v606 = vrot.slane %v605, 4
      %v607 = vmin.f32 %v605, %v606
      %v608 = vrot.slane %v607, 2
      %v609 = vmin.f32 %v607, %v608
      %v610 = vrot.slane %v609, 1
      %v611 = vmin.f32 %v609, %v610
      %vm612 = vcmp.ge.f32.partialorder %v513, 0.0
      %vm613 = vcmp.ge.f32.partialorder %v518, 0.0
      %vm614 = vcmp.ge.f32.partialorder %v523, 0.0
      %vm615 = vcmp.ge.f32.partialorder %v528, 0.0
      %vm616 = vcmp.ge.f32.partialorder %v533, 0.0
      %vm617 = vcmp.ge.f32.partialorder %v538, 0.0
      %vm618 = vcmp.ge.f32.partialorder %v543, 0.0
      %vm619 = vcmp.ge.f32.partialorder %v548, 0.0
      %vm620 = vcmp.ge.f32.partialorder %v553, 0.0
      %vm621 = vcmp.ge.f32.partialorder %v558, 0.0
      %vm622 = vcmp.ge.f32.partialorder %v563, 0.0
      %vm623 = vcmp.ge.f32.partialorder %v568, 0.0
      %vm624 = vcmp.ge.f32.partialorder %v573, 0.0
      %vm625 = vcmp.ge.f32.partialorder %v578, 0.0
      %vm626 = vcmp.ge.f32.partialorder %v583, 0.0
      %vm627 = vcmp.ge.f32.partialorder %v588, 0.0
      %vm628 = vcmp.le.f32.partialorder %v320, %v611
      %vm629 = vcmp.le.f32.partialorder %v325, %v611
      %vm630 = vcmp.le.f32.partialorder %v330, %v611
      %vm631 = vcmp.le.f32.partialorder %v335, %v611
      %vm632 = vcmp.le.f32.partialorder %v340, %v611
      %vm633 = vcmp.le.f32.partialorder %v345, %v611
      %vm634 = vcmp.le.f32.partialorder %v350, %v611
      %vm635 = vcmp.le.f32.partialorder %v355, %v611
      %vm636 = vcmp.le.f32.partialorder %v360, %v611
      %vm637 = vcmp.le.f32.partialorder %v365, %v611
      %vm638 = vcmp.le.f32.partialorder %v370, %v611
      %vm639 = vcmp.le.f32.partialorder %v375, %v611
      %vm640 = vcmp.le.f32.partialorder %v380, %v611
      %vm641 = vcmp.le.f32.partialorder %v385, %v611
      %vm642 = vcmp.le.f32.partialorder %v390, %v611
      %vm643 = vcmp.le.f32.partialorder %v395, %v611
      %vm644 = vcmp.lt.f32.partialorder %v320, 1.0
      %vm645 = vcmp.lt.f32.partialorder %v325, 1.0
      %vm646 = vcmp.lt.f32.partialorder %v330, 1.0
      %vm647 = vcmp.lt.f32.partialorder %v335, 1.0
      %vm648 = vcmp.lt.f32.partialorder %v340, 1.0
      %vm649 = vcmp.lt.f32.partialorder %v345, 1.0
      %vm650 = vcmp.lt.f32.partialorder %v350, 1.0
      %vm651 = vcmp.lt.f32.partialorder %v355, 1.0
      %vm652 = vcmp.lt.f32.partialorder %v360, 1.0
      %vm653 = vcmp.lt.f32.partialorder %v365, 1.0
      %vm654 = vcmp.lt.f32.partialorder %v370, 1.0
      %vm655 = vcmp.lt.f32.partialorder %v375, 1.0
      %vm656 = vcmp.lt.f32.partialorder %v380, 1.0
      %vm657 = vcmp.lt.f32.partialorder %v385, 1.0
      %vm658 = vcmp.lt.f32.partialorder %v390, 1.0
      %vm659 = vcmp.lt.f32.partialorder %v395, 1.0
      %vm660 = vmor %vm612, %vm644
      %vm661 = vmor %vm613, %vm645
      %vm662 = vmor %vm614, %vm646
      %vm663 = vmor %vm615, %vm647
      %vm664 = vmor %vm616, %vm648
      %vm665 = vmor %vm617, %vm649
      %vm666 = vmor %vm618, %vm650
      %vm667 = vmor %vm619, %vm651
      %vm668 = vmor %vm620, %vm652
      %vm669 = vmor %vm621, %vm653
      %vm670 = vmor %vm622, %vm654
      %vm671 = vmor %vm623, %vm655
      %vm672 = vmor %vm624, %vm656
      %vm673 = vmor %vm625, %vm657
      %vm674 = vmor %vm626, %vm658
      %vm675 = vmor %vm627, %vm659
      %vm676 = vmand %vm628, %vm660
      %vm677 = vmand %vm629, %vm661
      %vm678 = vmand %vm630, %vm662
      %vm679 = vmand %vm631, %vm663
      %vm680 = vmand %vm632, %vm664
      %vm681 = vmand %vm633, %vm665
      %vm682 = vmand %vm634, %vm666
      %vm683 = vmand %vm635, %vm667
      %vm684 = vmand %vm636, %vm668
      %vm685 = vmand %vm637, %vm669
      %vm686 = vmand %vm638, %vm670
      %vm687 = vmand %vm639, %vm671
      %vm688 = vmand %vm640, %vm672
      %vm689 = vmand %vm641, %vm673
      %vm690 = vmand %vm642, %vm674
      %vm691 = vmand %vm643, %vm675
      %v692 = vsel %vm612, 1.0, -1.0
      %v693 = vsel %vm613, 1.0, -1.0
      %v694 = vsel %vm614, 1.0, -1.0
      %v695 = vsel %vm615, 1.0, -1.0
      %v696 = vsel %vm616, 1.0, -1.0
      %v697 = vsel %vm617, 1.0, -1.0
      %v698 = vsel %vm618, 1.0, -1.0
      %v699 = vsel %vm619, 1.0, -1.0
      %v700 = vsel %vm620, 1.0, -1.0
      %v701 = vsel %vm621, 1.0, -1.0
      %v702 = vsel %vm622, 1.0, -1.0
      %v703 = vsel %vm623, 1.0, -1.0
      %v704 = vsel %vm624, 1.0, -1.0
      %v705 = vsel %vm625, 1.0, -1.0
      %v706 = vsel %vm626, 1.0, -1.0
      %v707 = vsel %vm627, 1.0, -1.0
      %v708 = vsel %vm676, %v692, 0.0
      %v709 = vsel %vm677, %v693, 0.0
      %v710 = vsel %vm678, %v694, 0.0
      %v711 = vsel %vm679, %v695, 0.0
      %v712 = vsel %vm680, %v696, 0.0
      %v713 = vsel %vm681, %v697, 0.0
      %v714 = vsel %vm682, %v698, 0.0
      %v715 = vsel %vm683, %v699, 0.0
      %v716 = vsel %vm684, %v700, 0.0
      %v717 = vsel %vm685, %v701, 0.0
      %v718 = vsel %vm686, %v702, 0.0
      %v719 = vsel %vm687, %v703, 0.0
      %v720 = vsel %vm688, %v704, 0.0
      %v721 = vsel %vm689, %v705, 0.0
      %v722 = vsel %vm690, %v706, 0.0
      %v723 = vsel %vm691, %v707, 0.0
      %724 = vmatprep.subr.mxu0 0.0
      %725 = vmatpush1.msra.mxu0 %v708
      %726 = vmatprep.subr.mxu0 0.0
      %727 = vmatpush1.msra.mxu0 %v709
      %728 = vmatprep.subr.mxu0 0.0
      %729 = vmatpush1.msra.mxu0 %v710
      %730 = vmatprep.subr.mxu0 0.0
      %731 = vmatpush1.msra.mxu0 %v711
      %732 = vmatprep.subr.mxu0 0.0
      %733 = vmatpush1.msra.mxu0 %v712
      %734 = vmatprep.subr.mxu0 0.0
      %735 = vmatpush1.msra.mxu0 %v713
      %736 = vmatprep.subr.mxu0 0.0
      %737 = vmatpush1.msra.mxu0 %v714
      %738 = vmatprep.subr.mxu0 0.0
      %739 = vmatpush1.msra.mxu0 %v715
      %740 = vmatprep.subr.mxu0 0.0
      %741 = vmatpush1.msra.mxu0 %v716
      %742 = vmatprep.subr.mxu0 0.0
      %743 = vmatpush1.msra.mxu0 %v717
      %744 = vmatprep.subr.mxu0 0.0
      %745 = vmatpush1.msra.mxu0 %v718
      %746 = vmatprep.subr.mxu0 0.0
      %747 = vmatpush1.msra.mxu0 %v719
      %748 = vmatprep.subr.mxu0 0.0
      %749 = vmatpush1.msra.mxu0 %v720
      %750 = vmatprep.subr.mxu0 0.0
      %751 = vmatpush1.msra.mxu0 %v721
      %752 = vmatprep.subr.mxu0 0.0
      %753 = vmatpush1.msra.mxu0 %v722
      %754 = vmatprep.subr.mxu0 0.0
      %755 = vmatpush1.msra.mxu0 %v723
      %756 = vmatprep.subr.mxu0 0.0
      %757 = vmatpush1.msra.mxu0 0.0
      %758 = vmatprep.subr.mxu0 0.0
      %759 = vmatpush1.msra.mxu0 0.0
      %760 = vmatprep.subr.mxu0 0.0
      %761 = vmatpush1.msra.mxu0 0.0
      %762 = vmatprep.subr.mxu0 0.0
      %763 = vmatpush1.msra.mxu0 0.0
      %764 = vmatprep.subr.mxu0 0.0
      %765 = vmatpush1.msra.mxu0 0.0
      %766 = vmatprep.subr.mxu0 0.0
      %767 = vmatpush1.msra.mxu0 0.0
      %768 = vmatprep.subr.mxu0 0.0
      %769 = vmatpush1.msra.mxu0 0.0
      %770 = vmatprep.subr.mxu0 0.0
      %771 = vmatpush1.msra.mxu0 0.0
      %772 = vmatprep.subr.mxu0 0.0
      %773 = vmatpush1.msra.mxu0 0.0
      %774 = vmatprep.subr.mxu0 0.0
      %775 = vmatpush1.msra.mxu0 0.0
      %776 = vmatprep.subr.mxu0 0.0
      %777 = vmatpush1.msra.mxu0 0.0
      %778 = vmatprep.subr.mxu0 0.0
      %779 = vmatpush1.msra.mxu0 0.0
      %780 = vmatprep.subr.mxu0 0.0
      %781 = vmatpush1.msra.mxu0 0.0
      %782 = vmatprep.subr.mxu0 0.0
      %783 = vmatpush1.msra.mxu0 0.0
      %784 = vmatprep.subr.mxu0 0.0
      %785 = vmatpush1.msra.mxu0 0.0
      %786 = vmatprep.subr.mxu0 0.0
      %787 = vmatpush1.msra.mxu0 0.0
      %788 = vmatprep.mubr.f32.mxu0 0.0
      %789 = vmatmul.mubr.f32.gmra.mrb[0].mxu0 %v52
      %v790 = vpop.f32.mrb[0].mxu0
      %v791 = vadd.f32 0.0, %v790
      %v792 = vpop.f32.mrb[0].mxu0
      %793 = vdwg.mxu0
      %vm794 = vcmp.gt.f32.partialorder %v611, 0.0
      %v795 = vrsqrt.pop %v611
      %v796 = vsel %vm794, %v795, 0.0
      %v798 = vrot.slane %v791, 2
      %v800 = vmul.f32 %v59, %v798
      %v801 = vsub.f32 %v800, %v791
      %v802 = vmul.f32 %v796, %v801
      %v803 = vmul.f32 %v60, %v798
      %v804 = vrot.slane %v791, 1
      %v806 = vsub.f32 %v803, %v804
      %v807 = vmul.f32 %v796, %v806
      %vm808 = vcmp.lt.f32.partialorder %v611, 1.0
      %vm809 = vcmp.gt.f32.partialorder %v791, 0.0
      %vm810 = vmor %vm808, %vm809
      %v811 = vsel %vm810, 1, 0
      %v812 = vcvt.s32.f32 %v811
      %v814 = vrot.slane %v812, 2
      %v816 = vsel %vm93, %v814, 0.0
      %817 = vadd.xlane.f32.xlu0 %v816
      %v818 = vpop.xlane.xlu0 %817
      %v819 = vrot.slane %v818, 4
      %v820 = vadd.f32 %v818, %v819
      %v821 = vrot.slane %v820, 2
      %v822 = vadd.f32 %v820, %v821
      %v823 = vrot.slane %v822, 1
      %v824 = vadd.f32 %v822, %v823
      %s825 = vtos %v824
      %s826 = sadd.f32 %s169, 1e-06
      %v827 = vstv %s826
      %v828 = vrcp.pop %v827
      %v829 = vmul.f32 %v828, 10.0
      %s830 = sadd.f32 %s825, 1e-06
      %v831 = vstv %s830
      %v832 = vrcp.pop %v831
      %v833 = vmul.f32 %v832, 5.0
      %v834 = vmul.f32 %v829, %v182
      %v835 = vmul.f32 %v833, %v802
      %v836 = vadd.f32 %v834, %v835
      %v837 = vmul.f32 %v829, %v190
      %v838 = vmul.f32 %v833, %v807
      %v839 = vadd.f32 %v837, %v838
      %v840 = vmul.f32 %v836, 0.5
      %v841 = vsub.f32 %v59, %v840
      %v842 = vsub.f32 %v841, %v18
      %v843 = vmax.f32 %v842, -0.1
      %v844 = vmin.f32 %v843, 0.1
      %v845 = vadd.f32 %v18, %v844
      %v846 = vmul.f32 %v839, 0.5
      %v847 = vsub.f32 %v60, %v846
      %v848 = vsub.f32 %v847, %v19
      %v849 = vmax.f32 %v848, -0.1
      %v850 = vmin.f32 %v849, 0.1
      %v851 = vadd.f32 %v19, %v850
    $region22: #{tpu_custom_call.1} parent=1 // loop_footer
      %s58 = sadd.s32 1, %s54
    $region23: #{tpu_custom_call.1} parent=1 // loop_footer_branch
      %53 = sbr.rel target = $region19
    $region24: #{tpu_custom_call.1} parent=1 // loop_exit
      _
    %v853 = vrot.slane %v60, 7
    %vm855 = vcmask 1040384
    %v856 = vsel %vm855, %v59, %v853
    %857 = vst [vmem:[#allocation2] sm:$0x3] %v856
    // Predicated region
    $region25: #{tpu_custom_call.1} parent=1 // pred_check
      _
    $region26: #{tpu_custom_call.1} parent=1 // pred_check_branch
      %859 = sbr.rel (0) target = $region28
    $region27: #{tpu_custom_call.1} parent=1 // pred_region
      %s861 = ssub.s32 32, 32
      %862 = vsyncadd [#allocation3], %s861
      %s864 = sshll.u32 [#allocation2], 4
      %s865 = int_to_ptr.vmem [resolvable:$true] %s864
      %867 = dma.vmem_to_hbm [thread:$0]  %s865, 32, %s4, [#allocation3]
    $region28: #{tpu_custom_call.1} parent=1 // pred_fallthru
      _
    // Predicated region
    $region29: #{tpu_custom_call.1} parent=1 // pred_check
      _
    $region30: #{tpu_custom_call.1} parent=1 // pred_check_branch
      %869 = sbr.rel (0) target = $region32
    $region31: #{tpu_custom_call.1} parent=1 // pred_region
      %870 = dma.done [#allocation3], 32
    $region32: #{tpu_custom_call.1} parent=1 // pred_fallthru
      _
    %871 = vsyncpa [#allocation3], 1

</llo_original>
